<compile_context>
chip_gen: v5e
topology: v5e:2x2
jax: 0.10.0
libtpu: 0.0.40
codegen_flags: <defaults>
</compile_context>

<pallas_src>
import functools

import numpy as np

import jax
import jax.numpy as jnp
from jax import lax
from jax.experimental import pallas as pl
from jax.experimental.pallas import tpu as pltpu


_LANE = 128
_CONV_STRIP_BYTES = 4 * 1024 * 1024      # target bf16 in+out slab per strip
_RESIZE_TILE_BYTES = 4 * 1024 * 1024     # target working set per channel tile
_VMEM_LIMIT = 32 * 1024 * 1024           # explicit scoped-VMEM limit (all gens)


def _round_up(x, m):
    return ((x + m - 1) // m) * m


# ----------------------------------------------------------------------------
# Fused conv kernel: per output-row strip, sum of shifted matmuls + bias
# (+ pre/post ReLU, residual/skip adds, optional fused 1x1 channel-mix conv).
# ----------------------------------------------------------------------------
def _conv_kernel(*refs, kh, kw, row_pitch, out_len, pre_relu, post_relu,
                 n_skip, has_mix, mix_relu):
    x_ref, w_ref, b_ref = refs[0], refs[1], refs[2]
    skip_refs = refs[3:3 + n_skip]
    pos = 3 + n_skip
    if has_mix:
        wm_ref, bm_ref = refs[pos], refs[pos + 1]
        pos += 2
    o_ref = refs[pos]

    x = x_ref[0, 0]                               # (Cin, Lin) bf16, flat strip
    if pre_relu:
        x = jnp.maximum(x, 0)

    # One pre-shifted copy per column offset c, reused across all kh row taps:
    # row-tap slices then start at a*row_pitch, which is vreg-aligned whenever
    # the row pitch is a multiple of 128 (production sizes).
    span = out_len + (kh - 1) * row_pitch
    xc = [x[:, c:c + span] for c in range(kw)]

    acc = None
    for a in range(kh):                           # unrolled over <= 9 taps
        for c in range(kw):
            part = jnp.dot(w_ref[a * kw + c],
                           xc[c][:, a * row_pitch:a * row_pitch + out_len],
                           preferred_element_type=jnp.float32)
            acc = part if acc is None else acc + part
    # TODO(synk): on v5e/v6e fold the kh*kw taps into one stacked-K matmul to
    # avoid the 8 VPU accumulate passes (v7x's MRB accumulates in place).

    y = acc + b_ref[...]                          # (Cout, L) + (Cout, 1)
    if post_relu:
        y = jnp.maximum(y, 0.0)
    for sref in skip_refs:                        # residual / skip adds
        y = y + sref[0, 0].astype(jnp.float32)
    if has_mix:                                   # fused 1x1 conv epilogue
        y = jnp.dot(wm_ref[...], y.astype(jnp.bfloat16),
                    preferred_element_type=jnp.float32) + bm_ref[...]
        if mix_relu:
            y = jnp.maximum(y, 0.0)
    o_ref[0, 0] = y.astype(o_ref.dtype)


def conv2d(x, w, b=None, padding=0, pre_relu=False, post_relu=False,
           skips=(), mix=None, out_dtype=jnp.bfloat16, strip_rows=None):
    """Stride-1 conv. x: NCHW, w: (Cout, Cin, kh, kw) (PyTorch layout).

    The spatially padded input is flattened row-major per output-row strip;
    tap (a, c) contributes W[:, :, a, c] @ x_flat[:, a*Wq + c :][:, :L].
    Output columns [OW, Wq) of each row are garbage and sliced off afterwards.
    Grid = (batch, strip), both "parallel".
    """
    N, Cin, H, W = x.shape
    Cout, _, kh, kw = w.shape
    Hp, Wp = H + 2 * padding, W + 2 * padding
    OH, OW = Hp - kh + 1, Wp - kw + 1

    # Lane-align the flattened row pitch when the padding overhead is <= 1/3.
    Wq_aligned = _round_up(Wp, _LANE)
    Wq = Wq_aligned if 3 * Wq_aligned <= 4 * Wp else Wp

    Cfin = Cout if mix is None else mix[0].shape[0]

    # Strip height: biggest strip whose bf16 in+out+skip slab fits the budget.
    if strip_rows is None:
        row_bytes = (Cin + max(Cout, Cfin) + sum(s.shape[1] for s in skips)) * Wq * 2
        r = max(1, _CONV_STRIP_BYTES // max(row_bytes, 1))
        if r < OH and r >= 8:
            r = (r // 8) * 8
        r = min(r, OH)
    else:
        r = max(1, min(strip_rows, OH))
    S = pl.cdiv(OH, r)
    halo = (kh - 1) + (1 if kw > 1 else 0)   # extra rows: row taps + kw-1 tail
    rows_in = r + halo
    L = r * Wq
    Lin = rows_in * Wq

    # ---- XLA-side staging: zero-pad + overlapping row strips ---------------
    # TODO(synk): the halo rows are duplicated in HBM here (~(1+halo/r)x input
    # bytes); an element-offset index_map or manual-DMA halo fetch would
    # remove this extra copy.
    xq = jnp.pad(x.astype(jnp.bfloat16),
                 ((0, 0), (0, 0),
                  (padding, S * r + halo - H - padding),
                  (padding, Wq - W - padding)))
    if S == 1:
        xs = xq.reshape(N, 1, Cin, Lin)
    else:
        xs = jnp.stack([xq[:, :, s * r:s * r + rows_in, :] for s in range(S)],
                       axis=1).reshape(N, S, Cin, Lin)

    wt = jnp.transpose(w, (2, 3, 0, 1)).reshape(kh * kw, Cout, Cin)
    wt = wt.astype(jnp.bfloat16)
    bias = jnp.zeros((Cout,), jnp.float32) if b is None else b.astype(jnp.float32)
    bias = bias.reshape(Cout, 1)

    inputs = [xs, wt, bias]
    in_specs = [
        pl.BlockSpec((1, 1, Cin, Lin), lambda n, s: (n, s, 0, 0)),
        pl.BlockSpec((kh * kw, Cout, Cin), lambda n, s: (0, 0, 0)),
        pl.BlockSpec((Cout, 1), lambda n, s: (0, 0)),
    ]

    for sk in skips:
        assert sk.shape[2] == OH and sk.shape[3] == OW
        Cs = sk.shape[1]
        sq = jnp.pad(sk.astype(jnp.bfloat16),
                     ((0, 0), (0, 0), (0, S * r - OH), (0, Wq - OW)))
        sq = sq.reshape(N, Cs, S, r, Wq).transpose(0, 2, 1, 3, 4)
        sq = sq.reshape(N, S, Cs, L)
        inputs.append(sq)
        in_specs.append(pl.BlockSpec((1, 1, Cs, L), lambda n, s: (n, s, 0, 0)))

    mix_relu = False
    if mix is not None:
        wm, bm, mix_relu = mix                    # wm: (C2, Cout, 1, 1)
        C2 = wm.shape[0]
        inputs.append(wm.reshape(C2, Cout).astype(jnp.bfloat16))
        inputs.append(bm.astype(jnp.float32).reshape(C2, 1))
        in_specs.append(pl.BlockSpec((C2, Cout), lambda n, s: (0, 0)))
        in_specs.append(pl.BlockSpec((C2, 1), lambda n, s: (0, 0)))

    kernel = functools.partial(
        _conv_kernel, kh=kh, kw=kw, row_pitch=Wq, out_len=L,
        pre_relu=pre_relu, post_relu=post_relu, n_skip=len(skips),
        has_mix=mix is not None, mix_relu=mix_relu)

    out_flat = pl.pallas_call(
        kernel,
        out_shape=jax.ShapeDtypeStruct((N, S, Cfin, L), out_dtype),
        grid=(N, S),
        in_specs=in_specs,
        out_specs=pl.BlockSpec((1, 1, Cfin, L), lambda n, s: (n, s, 0, 0)),
        compiler_params=pltpu.CompilerParams(
            dimension_semantics=("parallel", "parallel"),
            vmem_limit_bytes=_VMEM_LIMIT),
    )(*inputs)

    # TODO(synk): when S > 1 this un-stripping transpose is one extra XLA pass;
    # a strided output index_map would let the kernel store NCHW directly.
    out = out_flat.reshape(N, S, Cfin, r, Wq).transpose(0, 2, 1, 3, 4)
    out = out.reshape(N, Cfin, S * r, Wq)[:, :, :OH, :OW]
    return out


def conv_transpose2d(x, w, b, k):
    """ConvTranspose2d with kernel_size == stride == k, padding 0.
    Lowered to a 1x1 conv producing Cout*k*k channels, then rearranged."""
    N, Cin, H, W = x.shape
    Cout = w.shape[1]                         # torch layout (Cin, Cout, k, k)
    w1 = jnp.transpose(w, (1, 2, 3, 0)).reshape(Cout * k * k, Cin, 1, 1)
    b1 = jnp.repeat(b, k * k)
    y = conv2d(x, w1, b1, padding=0)          # (N, Cout*k*k, H, W)
    # TODO(synk): fuse this depth-to-space into the kernel's output index math
    # (or the next conv's input staging) to save one HBM round trip.
    y = y.reshape(N, Cout, k, k, H, W)
    y = jnp.transpose(y, (0, 1, 4, 2, 5, 3)).reshape(N, Cout, H * k, W * k)
    return y


# ----------------------------------------------------------------------------
# Fused separable bilinear resize (align_corners=True): channel-tiled grid,
# width pass = one lane-dense 2-D GEMM, height pass = per-channel 2-D GEMMs.
# ----------------------------------------------------------------------------
def _bilinear_matrix(in_size, out_size):
    """Row-stochastic matrix == F.interpolate(bilinear, align_corners=True)."""
    if out_size == 1:
        A = np.zeros((1, in_size), np.float32)
        A[0, 0] = 1.0
        return A
    idx = np.arange(out_size, dtype=np.float64)
    src = idx * (in_size - 1) / (out_size - 1)
    i0 = np.clip(np.floor(src).astype(np.int64), 0, in_size - 1)
    i1 = np.clip(i0 + 1, 0, in_size - 1)
    frac = (src - i0).astype(np.float32)
    A = np.zeros((out_size, in_size), np.float32)
    A[np.arange(out_size), i0] += 1.0 - frac
    A[np.arange(out_size), i1] += frac
    return A


def _resize_kernel(x_ref, awt_ref, ah_ref, o_ref):
    ct, H, W = x_ref.shape[1], x_ref.shape[2], x_ref.shape[3]
    OW = awt_ref.shape[1]
    x = x_ref[0]                                           # (Ct, H, W) bf16
    # Width pass: ONE lane-dense 2-D GEMM (Ct*H, W) @ (W, OW).
    t = jnp.dot(x.reshape(ct * H, W), awt_ref[...],
                preferred_element_type=jnp.float32)
    t = t.reshape(ct, H, OW).astype(jnp.bfloat16)
    ah = ah_ref[...]                                       # (OH, H) bf16
    for c in range(ct):                                    # unrolled channel tile
        o_ref[0, c] = jnp.dot(ah, t[c],
                              preferred_element_type=jnp.float32
                              ).astype(o_ref.dtype)


def _largest_divisor_leq(n, m):
    m = max(1, min(n, m))
    for d in range(m, 0, -1):
        if n % d == 0:
            return d
    return 1


def bilinear_resize(x, out_h, out_w, out_dtype=jnp.bfloat16):
    N, C, H, W = x.shape
    awt = jnp.asarray(_bilinear_matrix(W, out_w).T, jnp.bfloat16)    # (W, OW)
    ah = jnp.asarray(_bilinear_matrix(H, out_h), jnp.bfloat16)       # (OH, H)
    per_ch = (H * W + H * out_w + 2 * out_h * out_w) * 2             # bytes, bf16-ish
    ct = _largest_divisor_leq(C, max(1, _RESIZE_TILE_BYTES // max(per_ch, 1)))
    return pl.pallas_call(
        _resize_kernel,
        out_shape=jax.ShapeDtypeStruct((N, C, out_h, out_w), out_dtype),
        grid=(N, C // ct),
        in_specs=[
            pl.BlockSpec((1, ct, H, W), lambda n, c: (n, c, 0, 0)),
            pl.BlockSpec((W, out_w), lambda n, c: (0, 0)),
            pl.BlockSpec((out_h, H), lambda n, c: (0, 0)),
        ],
        out_specs=pl.BlockSpec((1, ct, out_h, out_w), lambda n, c: (n, c, 0, 0)),
        compiler_params=pltpu.CompilerParams(
            dimension_semantics=("parallel", "parallel"),
            vmem_limit_bytes=_VMEM_LIMIT),
    )(x.astype(jnp.bfloat16), awt, ah)


# ----------------------------------------------------------------------------
# DPTHead forward (use_clstoken=False, use_bn=False)
# ----------------------------------------------------------------------------
def _fusion_block(p, x0, x1, size):
    # ResidualConvUnit1 (+ outer add), fused into two conv kernels.
    # TODO(synk): fuse each RCU's two 3x3 convs into one kernel by re-zero-
    # padding the intermediate inside VMEM per strip.
    if x1 is not None:
        h = conv2d(x1, p['rcu1']['c1w'], p['rcu1']['c1b'], padding=1,
                   pre_relu=True)
        out = conv2d(h, p['rcu1']['c2w'], p['rcu1']['c2b'], padding=1,
                     pre_relu=True, skips=(x1, x0))
    else:
        out = x0
    # ResidualConvUnit2; the 1x1 out_conv is fused as a channel-mix epilogue
    # (it commutes exactly with the align_corners bilinear resize).
    h = conv2d(out, p['rcu2']['c1w'], p['rcu2']['c1b'], padding=1,
               pre_relu=True)
    out = conv2d(h, p['rcu2']['c2w'], p['rcu2']['c2b'], padding=1,
                 pre_relu=True, skips=(out,),
                 mix=(p['ocw'], p['ocb'], False))
    if size is None:                               # scale_factor = 2
        oh, ow = out.shape[2] * 2, out.shape[3] * 2
    else:
        oh, ow = size
    return bilinear_resize(out, oh, ow)


def dpt_head_forward(p, out_features, patch_h, patch_w):
    outs = []
    for i, feat in enumerate(out_features):
        x = feat[0]                                # (B, patch_h*patch_w, C)
        B, _, C = x.shape
        x = jnp.transpose(x, (0, 2, 1)).reshape(B, C, patch_h, patch_w)
        pr = p['projects'][i]
        x = conv2d(x, pr['w'], pr['b'])            # 1x1 projection
        if i == 0:
            x = conv_transpose2d(x, p['resize0']['w'], p['resize0']['b'], 4)
        elif i == 1:
            x = conv_transpose2d(x, p['resize1']['w'], p['resize1']['b'], 2)
        elif i == 3:
            # 3x3 stride-2 conv == stride-1 conv subsampled at even positions.
            # TODO(synk): subsample inside the kernel store instead of XLA.
            x = conv2d(x, p['resize3']['w'], p['resize3']['b'],
                       padding=1)[:, :, ::2, ::2]
        outs.append(x)

    rn = [conv2d(l, w, None, padding=1) for l, w in zip(outs, p['layer_rn'])]
    l1rn, l2rn, l3rn, l4rn = rn

    path4 = _fusion_block(p['refine'][3], l4rn, None,
                          (l3rn.shape[2], l3rn.shape[3]))
    path3 = _fusion_block(p['refine'][2], path4, l3rn,
                          (l2rn.shape[2], l2rn.shape[3]))
    path2 = _fusion_block(p['refine'][1], path3, l2rn,
                          (l1rn.shape[2], l1rn.shape[3]))
    path1 = _fusion_block(p['refine'][0], path2, l1rn, None)

    out = conv2d(path1, p['out_conv1_w'], p['out_conv1_b'], padding=1)
    out = bilinear_resize(out, int(patch_h * 14), int(patch_w * 14))
    # output_conv2: [3x3 conv + ReLU] with the final [1x1 conv + ReLU] fused
    # as a channel-mix epilogue in the same kernel.
    out = conv2d(out, p['oc2_w1'], p['oc2_b1'], padding=1, post_relu=True,
                 mix=(p['oc2_w2'], p['oc2_b2'], True), out_dtype=jnp.float32)
    return out


# ----------------------------------------------------------------------------
# Deterministic parameter init (synthetic — shapes mirror the nn.Module)
# ----------------------------------------------------------------------------
def init_params(key, in_channels, features, out_channels):
    keys = iter(jax.random.split(key, 80))

    def w(shape, fan_in):
        return jax.random.normal(next(keys), shape, jnp.float32) / jnp.sqrt(fan_in)

    def b(c):
        return jax.random.normal(next(keys), (c,), jnp.float32) * 0.01

    p = {}
    p['projects'] = [{'w': w((oc, in_channels, 1, 1), in_channels), 'b': b(oc)}
                     for oc in out_channels]
    p['resize0'] = {'w': w((out_channels[0], out_channels[0], 4, 4), out_channels[0] * 16),
                    'b': b(out_channels[0])}
    p['resize1'] = {'w': w((out_channels[1], out_channels[1], 2, 2), out_channels[1] * 4),
                    'b': b(out_channels[1])}
    p['resize3'] = {'w': w((out_channels[3], out_channels[3], 3, 3), out_channels[3] * 9),
                    'b': b(out_channels[3])}
    p['layer_rn'] = [w((features, oc, 3, 3), oc * 9) for oc in out_channels]  # bias=False

    def rcu():
        return {'c1w': w((features, features, 3, 3), features * 9), 'c1b': b(features),
                'c2w': w((features, features, 3, 3), features * 9), 'c2b': b(features)}

    def ffb():
        return {'rcu1': rcu(), 'rcu2': rcu(),
                'ocw': w((features, features, 1, 1), features), 'ocb': b(features)}

    p['refine'] = [ffb() for _ in range(4)]   # [0]=refinenet1 ... [3]=refinenet4
    p['out_conv1_w'] = w((features // 2, features, 3, 3), features * 9)
    p['out_conv1_b'] = b(features // 2)
    p['oc2_w1'] = w((32, features // 2, 3, 3), (features // 2) * 9)
    p['oc2_b1'] = b(32)
    p['oc2_w2'] = w((1, 32, 1, 1), 32)
    p['oc2_b2'] = b(1)
    return p


# ----------------------------------------------------------------------------
if __name__ == "__main__":
    # ---- correctness spot-checks against pure-JAX references ---------------
    # Multi-strip conv (exercises S > 1 tiling) vs lax.conv in f32.
    xt = jax.random.normal(jax.random.PRNGKey(1), (1, 8, 24, 20), jnp.float32)
    wt_ = jax.random.normal(jax.random.PRNGKey(2), (16, 8, 3, 3), jnp.float32) * 0.2
    bt = jax.random.normal(jax.random.PRNGKey(3), (16,), jnp.float32) * 0.1
    got = conv2d(xt, wt_, bt, padding=1, strip_rows=8)
    ref = lax.conv_general_dilated(
        xt, wt_, (1, 1), ((1, 1), (1, 1)),
        dimension_numbers=("NCHW", "OIHW", "NCHW")) + bt[None, :, None, None]
    np.testing.assert_allclose(np.asarray(got.astype(jnp.float32)),
                               np.asarray(ref), rtol=3e-2, atol=3e-2)

    # Bilinear resize vs dense einsum with the same (f32) matrices.
    xr = jax.random.normal(jax.random.PRNGKey(4), (1, 8, 5, 7), jnp.float32)
    gotr = bilinear_resize(xr, 9, 11)
    Ah = jnp.asarray(_bilinear_matrix(5, 9))
    Aw = jnp.asarray(_bilinear_matrix(7, 11))
    refr = jnp.einsum("oh,nchw,pw->ncop", Ah, xr, Aw)
    np.testing.assert_allclose(np.asarray(gotr.astype(jnp.float32)),
                               np.asarray(refr), rtol=3e-2, atol=3e-2)

    # ---- full DPTHead forward at small shapes -------------------------------
    in_channels = 32
    features = 32
    out_channels = [16, 32, 64, 64]
    patch_h = patch_w = 4
    B = 2

    key = jax.random.PRNGKey(0)
    pkey, fkey = jax.random.split(key)
    params = init_params(pkey, in_channels, features, out_channels)

    fkeys = jax.random.split(fkey, 8)
    # out_features[i] = (patch_tokens, cls_token); cls unused (use_clstoken=False)
    out_features = tuple(
        (jax.random.normal(fkeys[2 * i], (B, patch_h * patch_w, in_channels), jnp.float32),
         jax.random.normal(fkeys[2 * i + 1], (B, in_channels), jnp.float32))
        for i in range(4)
    )

    fwd = jax.jit(functools.partial(dpt_head_forward,
                                    patch_h=patch_h, patch_w=patch_w))
    out = fwd(params, out_features)
    jax.block_until_ready(out)
    assert out.shape == (B, 1, patch_h * 14, patch_w * 14), out.shape
    assert bool(jnp.all(jnp.isfinite(out)))
    assert bool(jnp.all(out >= 0.0))   # final ReLU
    print("KERNEL_OK")
</pallas_src>

<mosaic_0001>
module attributes {stable_mosaic.version = 11 : i64} {
  func.func @_conv_kernel(%arg0: i32, %arg1: i32, %arg2: memref<1x1x8x242xbf16, #tpu.memory_space<vmem>>, %arg3: memref<9x16x8xbf16, #tpu.memory_space<vmem>>, %arg4: memref<16x1xf32, #tpu.memory_space<vmem>>, %arg5: memref<1x1x16x176xbf16, #tpu.memory_space<vmem>>) attributes {dimension_semantics = [#tpu.dimension_semantics<parallel>, #tpu.dimension_semantics<parallel>], iteration_bounds = array<i64: 1, 3>, scalar_prefetch = 0 : i64, scratch_operands = 0 : i64, tpu.core_type = #tpu.core_type<tc>, window_params = [{transform_indices = @transform_0, window_bounds = array<i64: 1, 1, 8, 242>}, {pipeline_mode = #tpu.pipeline_mode<synchronous>, transform_indices = @transform_1, window_bounds = array<i64: 9, 16, 8>}, {pipeline_mode = #tpu.pipeline_mode<synchronous>, transform_indices = @transform_2, window_bounds = array<i64: 16, 1>}, {transform_indices = @transform_3, window_bounds = array<i64: 1, 1, 16, 176>}]} {
    %c0 = arith.constant 0 : index
    %c0_0 = arith.constant 0 : index
    %c0_1 = arith.constant 0 : index
    %c0_2 = arith.constant 0 : index
    %0 = vector.load %arg2[%c0, %c0_0, %c0_1, %c0_2] : memref<1x1x8x242xbf16, #tpu.memory_space<vmem>>, vector<1x1x8x242xbf16>
    %1 = vector.shape_cast %0 : vector<1x1x8x242xbf16> to vector<8x242xbf16>
    %2 = vector.extract_strided_slice %1 {offsets = [0, 0], sizes = [8, 220], strides = [1, 1]} : vector<8x242xbf16> to vector<8x220xbf16>
    %3 = vector.extract_strided_slice %1 {offsets = [0, 1], sizes = [8, 220], strides = [1, 1]} : vector<8x242xbf16> to vector<8x220xbf16>
    %4 = vector.extract_strided_slice %1 {offsets = [0, 2], sizes = [8, 220], strides = [1, 1]} : vector<8x242xbf16> to vector<8x220xbf16>
    %c0_3 = arith.constant 0 : index
    %c0_4 = arith.constant 0 : index
    %c0_5 = arith.constant 0 : index
    %5 = vector.load %arg3[%c0_3, %c0_4, %c0_5] : memref<9x16x8xbf16, #tpu.memory_space<vmem>>, vector<1x16x8xbf16>
    %6 = vector.shape_cast %5 : vector<1x16x8xbf16> to vector<16x8xbf16>
    %7 = vector.extract_strided_slice %2 {offsets = [0, 0], sizes = [8, 176], strides = [1, 1]} : vector<8x220xbf16> to vector<8x176xbf16>
    %cst = arith.constant dense<0.000000e+00> : vector<16x176xf32>
    %8 = tpu.matmul %6, %7, %cst {dimension_numbers = #tpu.dot_dimension_numbers<[1], [0], [0], [1], [0, 0, 1, 1], [], []>} : vector<16x8xbf16>, vector<8x176xbf16>, vector<16x176xf32> -> vector<16x176xf32>
    %c1 = arith.constant 1 : index
    %c0_6 = arith.constant 0 : index
    %c0_7 = arith.constant 0 : index
    %9 = vector.load %arg3[%c1, %c0_6, %c0_7] : memref<9x16x8xbf16, #tpu.memory_space<vmem>>, vector<1x16x8xbf16>
    %10 = vector.shape_cast %9 : vector<1x16x8xbf16> to vector<16x8xbf16>
    %11 = vector.extract_strided_slice %3 {offsets = [0, 0], sizes = [8, 176], strides = [1, 1]} : vector<8x220xbf16> to vector<8x176xbf16>
    %cst_8 = arith.constant dense<0.000000e+00> : vector<16x176xf32>
    %12 = tpu.matmul %10, %11, %cst_8 {dimension_numbers = #tpu.dot_dimension_numbers<[1], [0], [0], [1], [0, 0, 1, 1], [], []>} : vector<16x8xbf16>, vector<8x176xbf16>, vector<16x176xf32> -> vector<16x176xf32>
    %13 = arith.addf %8, %12 : vector<16x176xf32>
    %c2 = arith.constant 2 : index
    %c0_9 = arith.constant 0 : index
    %c0_10 = arith.constant 0 : index
    %14 = vector.load %arg3[%c2, %c0_9, %c0_10] : memref<9x16x8xbf16, #tpu.memory_space<vmem>>, vector<1x16x8xbf16>
    %15 = vector.shape_cast %14 : vector<1x16x8xbf16> to vector<16x8xbf16>
    %16 = vector.extract_strided_slice %4 {offsets = [0, 0], sizes = [8, 176], strides = [1, 1]} : vector<8x220xbf16> to vector<8x176xbf16>
    %cst_11 = arith.constant dense<0.000000e+00> : vector<16x176xf32>
    %17 = tpu.matmul %15, %16, %cst_11 {dimension_numbers = #tpu.dot_dimension_numbers<[1], [0], [0], [1], [0, 0, 1, 1], [], []>} : vector<16x8xbf16>, vector<8x176xbf16>, vector<16x176xf32> -> vector<16x176xf32>
    %18 = arith.addf %13, %17 : vector<16x176xf32>
    %c3 = arith.constant 3 : index
    %c0_12 = arith.constant 0 : index
    %c0_13 = arith.constant 0 : index
    %19 = vector.load %arg3[%c3, %c0_12, %c0_13] : memref<9x16x8xbf16, #tpu.memory_space<vmem>>, vector<1x16x8xbf16>
    %20 = vector.shape_cast %19 : vector<1x16x8xbf16> to vector<16x8xbf16>
    %21 = vector.extract_strided_slice %2 {offsets = [0, 22], sizes = [8, 176], strides = [1, 1]} : vector<8x220xbf16> to vector<8x176xbf16>
    %cst_14 = arith.constant dense<0.000000e+00> : vector<16x176xf32>
    %22 = tpu.matmul %20, %21, %cst_14 {dimension_numbers = #tpu.dot_dimension_numbers<[1], [0], [0], [1], [0, 0, 1, 1], [], []>} : vector<16x8xbf16>, vector<8x176xbf16>, vector<16x176xf32> -> vector<16x176xf32>
    %23 = arith.addf %18, %22 : vector<16x176xf32>
    %c4 = arith.constant 4 : index
    %c0_15 = arith.constant 0 : index
    %c0_16 = arith.constant 0 : index
    %24 = vector.load %arg3[%c4, %c0_15, %c0_16] : memref<9x16x8xbf16, #tpu.memory_space<vmem>>, vector<1x16x8xbf16>
    %25 = vector.shape_cast %24 : vector<1x16x8xbf16> to vector<16x8xbf16>
    %26 = vector.extract_strided_slice %3 {offsets = [0, 22], sizes = [8, 176], strides = [1, 1]} : vector<8x220xbf16> to vector<8x176xbf16>
    %cst_17 = arith.constant dense<0.000000e+00> : vector<16x176xf32>
    %27 = tpu.matmul %25, %26, %cst_17 {dimension_numbers = #tpu.dot_dimension_numbers<[1], [0], [0], [1], [0, 0, 1, 1], [], []>} : vector<16x8xbf16>, vector<8x176xbf16>, vector<16x176xf32> -> vector<16x176xf32>
    %28 = arith.addf %23, %27 : vector<16x176xf32>
    %c5 = arith.constant 5 : index
    %c0_18 = arith.constant 0 : index
    %c0_19 = arith.constant 0 : index
    %29 = vector.load %arg3[%c5, %c0_18, %c0_19] : memref<9x16x8xbf16, #tpu.memory_space<vmem>>, vector<1x16x8xbf16>
    %30 = vector.shape_cast %29 : vector<1x16x8xbf16> to vector<16x8xbf16>
    %31 = vector.extract_strided_slice %4 {offsets = [0, 22], sizes = [8, 176], strides = [1, 1]} : vector<8x220xbf16> to vector<8x176xbf16>
    %cst_20 = arith.constant dense<0.000000e+00> : vector<16x176xf32>
    %32 = tpu.matmul %30, %31, %cst_20 {dimension_numbers = #tpu.dot_dimension_numbers<[1], [0], [0], [1], [0, 0, 1, 1], [], []>} : vector<16x8xbf16>, vector<8x176xbf16>, vector<16x176xf32> -> vector<16x176xf32>
    %33 = arith.addf %28, %32 : vector<16x176xf32>
    %c6 = arith.constant 6 : index
    %c0_21 = arith.constant 0 : index
    %c0_22 = arith.constant 0 : index
    %34 = vector.load %arg3[%c6, %c0_21, %c0_22] : memref<9x16x8xbf16, #tpu.memory_space<vmem>>, vector<1x16x8xbf16>
    %35 = vector.shape_cast %34 : vector<1x16x8xbf16> to vector<16x8xbf16>
    %36 = vector.extract_strided_slice %2 {offsets = [0, 44], sizes = [8, 176], strides = [1, 1]} : vector<8x220xbf16> to vector<8x176xbf16>
    %cst_23 = arith.constant dense<0.000000e+00> : vector<16x176xf32>
    %37 = tpu.matmul %35, %36, %cst_23 {dimension_numbers = #tpu.dot_dimension_numbers<[1], [0], [0], [1], [0, 0, 1, 1], [], []>} : vector<16x8xbf16>, vector<8x176xbf16>, vector<16x176xf32> -> vector<16x176xf32>
    %38 = arith.addf %33, %37 : vector<16x176xf32>
    %c7 = arith.constant 7 : index
    %c0_24 = arith.constant 0 : index
    %c0_25 = arith.constant 0 : index
    %39 = vector.load %arg3[%c7, %c0_24, %c0_25] : memref<9x16x8xbf16, #tpu.memory_space<vmem>>, vector<1x16x8xbf16>
    %40 = vector.shape_cast %39 : vector<1x16x8xbf16> to vector<16x8xbf16>
    %41 = vector.extract_strided_slice %3 {offsets = [0, 44], sizes = [8, 176], strides = [1, 1]} : vector<8x220xbf16> to vector<8x176xbf16>
    %cst_26 = arith.constant dense<0.000000e+00> : vector<16x176xf32>
    %42 = tpu.matmul %40, %41, %cst_26 {dimension_numbers = #tpu.dot_dimension_numbers<[1], [0], [0], [1], [0, 0, 1, 1], [], []>} : vector<16x8xbf16>, vector<8x176xbf16>, vector<16x176xf32> -> vector<16x176xf32>
    %43 = arith.addf %38, %42 : vector<16x176xf32>
    %c8 = arith.constant 8 : index
    %c0_27 = arith.constant 0 : index
    %c0_28 = arith.constant 0 : index
    %44 = vector.load %arg3[%c8, %c0_27, %c0_28] : memref<9x16x8xbf16, #tpu.memory_space<vmem>>, vector<1x16x8xbf16>
    %45 = vector.shape_cast %44 : vector<1x16x8xbf16> to vector<16x8xbf16>
    %46 = vector.extract_strided_slice %4 {offsets = [0, 44], sizes = [8, 176], strides = [1, 1]} : vector<8x220xbf16> to vector<8x176xbf16>
    %cst_29 = arith.constant dense<0.000000e+00> : vector<16x176xf32>
    %47 = tpu.matmul %45, %46, %cst_29 {dimension_numbers = #tpu.dot_dimension_numbers<[1], [0], [0], [1], [0, 0, 1, 1], [], []>} : vector<16x8xbf16>, vector<8x176xbf16>, vector<16x176xf32> -> vector<16x176xf32>
    %48 = arith.addf %43, %47 : vector<16x176xf32>
    %c0_30 = arith.constant 0 : index
    %c0_31 = arith.constant 0 : index
    %49 = vector.load %arg4[%c0_30, %c0_31] : memref<16x1xf32, #tpu.memory_space<vmem>>, vector<16x1xf32>
    %50 = vector.broadcast %49 : vector<16x1xf32> to vector<16x176xf32>
    %51 = arith.addf %48, %50 : vector<16x176xf32>
    %52 = arith.truncf %51 : vector<16x176xf32> to vector<16x176xbf16>
    %c0_32 = arith.constant 0 : index
    %c0_33 = arith.constant 0 : index
    %c0_34 = arith.constant 0 : index
    %c0_35 = arith.constant 0 : index
    %53 = vector.load %arg5[%c0_32, %c0_33, %c0_34, %c0_35] : memref<1x1x16x176xbf16, #tpu.memory_space<vmem>>, vector<1x1x16x176xbf16>
    %54 = vector.shape_cast %53 : vector<1x1x16x176xbf16> to vector<16x176xbf16>
    %55 = vector.shape_cast %52 : vector<16x176xbf16> to vector<1x1x16x176xbf16>
    tpu.vector_store %arg5[%c0_32, %c0_33, %c0_34, %c0_35], %55 {strides = array<i32>} : memref<1x1x16x176xbf16, #tpu.memory_space<vmem>>, vector<1x1x16x176xbf16>,
    return
  }
  func.func @transform_0(%arg0: i32, %arg1: i32) -> (i32, i32, i32, i32) {
    %c0_i32 = arith.constant 0 : i32
    %c0_i32_0 = arith.constant 0 : i32
    %c0_i32_1 = arith.constant 0 : i32
    return %arg0, %arg1, %c0_i32, %c0_i32_0 : i32, i32, i32, i32
  }
  func.func @transform_1(%arg0: i32, %arg1: i32) -> (i32, i32, i32) {
    %c0_i32 = arith.constant 0 : i32
    %c0_i32_0 = arith.constant 0 : i32
    %c0_i32_1 = arith.constant 0 : i32
    %c0_i32_2 = arith.constant 0 : i32
    return %c0_i32, %c0_i32_0, %c0_i32_1 : i32, i32, i32
  }
  func.func @transform_2(%arg0: i32, %arg1: i32) -> (i32, i32) {
    %c0_i32 = arith.constant 0 : i32
    %c0_i32_0 = arith.constant 0 : i32
    %c0_i32_1 = arith.constant 0 : i32
    return %c0_i32, %c0_i32_0 : i32, i32
  }
  func.func @transform_3(%arg0: i32, %arg1: i32) -> (i32, i32, i32, i32) {
    %c0_i32 = arith.constant 0 : i32
    %c0_i32_0 = arith.constant 0 : i32
    %c0_i32_1 = arith.constant 0 : i32
    return %arg0, %arg1, %c0_i32, %c0_i32_0 : i32, i32, i32, i32
  }
}

</mosaic_0001>

<llo_original>
// kernel: tpu_custom_call.1
$region0: #{tpu_custom_call.1}
  #allocation0 [shape = 'u32[]', space=smem, size = 0x4, offset = 0x4, fixed_abs, tag = 'smem constant byte address 0x4 - core index']
  #allocation1 [shape = 'u32[72,128]{1,0:T(1,128)}', space=vmem, size = 0x9000, scoped, tag = 'internal scratch']
  %s0 = inlined_call_operand.vmem [shape: bf16[1,3,8,242], index: 0, kind: input, shape index: {}]
  %s1 = inlined_call_operand.vmem [shape: bf16[9,16,8], index: 1, kind: input, shape index: {}]
  %s2 = inlined_call_operand.vmem [shape: f32[16,1], index: 2, kind: input, shape index: {}]
  %s3 = inlined_call_operand.hbm [shape: bf16[1,3,16,176], index: 3, kind: output, shape index: {}]
  %s4 = sld [smem:[#allocation0]]
  $region45: #{tpu_custom_call.1} parent=0
    _
  %s6 = ssub.s32 1, %s4
  %s7 = scalar_select 0, %s6, %s4
  $region1: #{tpu_custom_call.1} parent=0
    #allocation2 [shape = 'u8[16384]{0}', space=vmem, size = 0x4000, scoped, tag = 'output window, operand 0']
    #allocation3 [shape = 's32[2]{0}', space=sflag, size = 0x8, scoped, tag = 'scoped memory for tpu_custom_call.1']
    %8 = vsyncpa [#allocation3], 0
    %s9 = scalar_lea.sflag [#allocation3], 1
    %10 = vsyncpa %s9, 0
    loop: start=0, step=1, limit=5
    $region2: #{tpu_custom_call.1} parent=1 // loop_pre_header
      _
    $region3: #{tpu_custom_call.1} parent=1 // loop_header
      %s12 = sphi 0, %s16
      %p13 = scmp.ge.s32.totalorder %s12, 5
      %s19 = sphi 0, %s31
      %s20 = sphi 0, %s27
      %s21 = sphi 0, %s19
      %s22 = sphi 0, %s20
      %s23 = sphi 0, %s21
      %s24 = sphi 0, %s22
      %s36 = sphi 0, %s38
      %s39 = sphi 0, %s36
      %s40 = sphi 0, %s39
      %s56 = sphi 0, %s40
      %s60 = sphi 0, %s60
      %s62 = sphi 0, %s60
      %s63 = sphi 0, %s62
      %s77 = sphi 0, %s63
      %s81 = sphi 0, %s81
      %s83 = sphi 0, %s81
      %s84 = sphi 0, %s83
      %s98 = sphi 0, %s84
      %s106 = sphi 0, %s108
      %s109 = sphi 0, %s106
      %s110 = sphi 0, %s109
      %s126 = sphi 0, %s110
    $region4: #{tpu_custom_call.1} parent=1 // loop_header_branch
      %15 = sbr.rel (%p13) target = $region8
    $region5: #{tpu_custom_call.1} parent=1 // loop_body
      %s17 = ssub.s32 %s12, 1
      %s18 = ssub.s32 %s12, 2
      %s25 = sadd.s32 1, %s20
      %p26 = scmp.ge.s32.totalorder %s25, 3
      %s27 = scalar_select %p26, 0, %s25
      %s28 = sadd.s32 1, %s19
      %s29 = scalar_select %p26, %s28, %s19
      %p30 = scmp.ge.s32.totalorder %s29, 1
      %s31 = scalar_select %p30, 0, %s29
      %s32 = ssub.s32 %s19, %s31
      %s33 = ssub.s32 %s20, %s27
      %s34 = sor.u32 %s32, %s33
      %p35 = scmp.eq.s32.totalorder %s34, 0
      %s37 = sadd.s32 %s36, 1
      %s38 = scalar_select %p35, %s36, %s37
      %p41 = pneg %p35
      %p42 = scmp.eq.s32.totalorder %s12, 2
      %p43 = por %p41, %p42
      %p44 = scmp.ne.s32.totalorder %s36, %s39
      %p45 = scmp.eq.s32.totalorder %s12, 0
      %p46 = por %p44, %p45
      %p47 = scmp.ne.s32.totalorder %s36, %s39
      %p48 = scmp.eq.s32.totalorder %s17, 2
      %p49 = por %p47, %p48
      %p50 = scmp.ne.s32.totalorder %s39, %s40
      %p51 = scmp.eq.s32.totalorder %s17, 0
      %p52 = por %p50, %p51
      %p53 = scmp.ne.s32.totalorder %s39, %s40
      %p54 = scmp.eq.s32.totalorder %s18, 2
      %p55 = por %p53, %p54
      %p57 = scmp.ne.s32.totalorder %s40, %s56
      %p58 = scmp.eq.s32.totalorder %s18, 0
      %p59 = por %p57, %p58
      %s61 = sadd.s32 %s60, 1
      %p64 = scmp.eq.s32.totalorder %s12, 2
      %p65 = scmp.ne.s32.totalorder %s60, %s62
      %p66 = scmp.eq.s32.totalorder %s12, 0
      %p67 = por %p65, %p66
      %p68 = scmp.ne.s32.totalorder %s60, %s62
      %p69 = scmp.eq.s32.totalorder %s17, 2
      %p70 = por %p68, %p69
      %p71 = scmp.ne.s32.totalorder %s62, %s63
      %p72 = scmp.eq.s32.totalorder %s17, 0
      %p73 = por %p71, %p72
      %p74 = scmp.ne.s32.totalorder %s62, %s63
      %p75 = scmp.eq.s32.totalorder %s18, 2
      %p76 = por %p74, %p75
      %p78 = scmp.ne.s32.totalorder %s63, %s77
      %p79 = scmp.eq.s32.totalorder %s18, 0
      %p80 = por %p78, %p79
      %s82 = sadd.s32 %s81, 1
      %p85 = scmp.eq.s32.totalorder %s12, 2
      %p86 = scmp.ne.s32.totalorder %s81, %s83
      %p87 = scmp.eq.s32.totalorder %s12, 0
      %p88 = por %p86, %p87
      %p89 = scmp.ne.s32.totalorder %s81, %s83
      %p90 = scmp.eq.s32.totalorder %s17, 2
      %p91 = por %p89, %p90
      %p92 = scmp.ne.s32.totalorder %s83, %s84
      %p93 = scmp.eq.s32.totalorder %s17, 0
      %p94 = por %p92, %p93
      %p95 = scmp.ne.s32.totalorder %s83, %s84
      %p96 = scmp.eq.s32.totalorder %s18, 2
      %p97 = por %p95, %p96
      %p99 = scmp.ne.s32.totalorder %s84, %s98
      %p100 = scmp.eq.s32.totalorder %s18, 0
      %p101 = por %p99, %p100
      %s102 = ssub.s32 %s19, %s31
      %s103 = ssub.s32 %s20, %s27
      %s104 = sor.u32 %s102, %s103
      %p105 = scmp.eq.s32.totalorder %s104, 0
      %s107 = sadd.s32 %s106, 1
      %s108 = scalar_select %p105, %s106, %s107
      %p111 = pneg %p105
      %p112 = scmp.eq.s32.totalorder %s12, 2
      %p113 = por %p111, %p112
      %p114 = scmp.ne.s32.totalorder %s106, %s109
      %p115 = scmp.eq.s32.totalorder %s12, 0
      %p116 = por %p114, %p115
      %p117 = scmp.ne.s32.totalorder %s106, %s109
      %p118 = scmp.eq.s32.totalorder %s17, 2
      %p119 = por %p117, %p118
      %p120 = scmp.ne.s32.totalorder %s109, %s110
      %p121 = scmp.eq.s32.totalorder %s17, 0
      %p122 = por %p120, %p121
      %p123 = scmp.ne.s32.totalorder %s109, %s110
      %p124 = scmp.eq.s32.totalorder %s18, 2
      %p125 = por %p123, %p124
      %p127 = scmp.ne.s32.totalorder %s110, %s126
      %p128 = scmp.eq.s32.totalorder %s18, 0
      %p129 = por %p127, %p128
      %p130 = scmp.le.s32.totalorder 1, %s12
      %p131 = scmp.lt.s32.totalorder %s12, 4
      %p132 = pnand %p130, %p131
      %p133 = pneg %p132
      // Predicated region
      $region9: #{tpu_custom_call.1} parent=5 // pred_check
        _
      $region10: #{tpu_custom_call.1} parent=5 // pred_check_branch
        %135 = sbr.rel (%p132) target = $region12
      $region11: #{tpu_custom_call.1} parent=5 // pred_region
        %s136 = ssub.s32 %s12, 1
        // Predicated region
        $region13: #{tpu_custom_call.1} parent=11 // pred_check
          %p137 = pneg %p73
        $region14: #{tpu_custom_call.1} parent=11 // pred_check_branch
          %139 = sbr.rel (%p137) target = $region16
        $region15: #{tpu_custom_call.1} parent=11 // pred_region
          _
        $region16: #{tpu_custom_call.1} parent=11 // pred_fallthru
          _
        // Predicated region
        $region17: #{tpu_custom_call.1} parent=11 // pred_check
          %p140 = pneg %p94
        $region18: #{tpu_custom_call.1} parent=11 // pred_check_branch
          %142 = sbr.rel (%p140) target = $region20
        $region19: #{tpu_custom_call.1} parent=11 // pred_region
          _
        $region20: #{tpu_custom_call.1} parent=11 // pred_fallthru
          _
      $region12: #{tpu_custom_call.1} parent=5 // pred_fallthru
        _
      %p143 = scmp.lt.s32.totalorder %s12, 3
      // Predicated region
      $region21: #{tpu_custom_call.1} parent=5 // pred_check
        %p144 = pneg %p143
      $region22: #{tpu_custom_call.1} parent=5 // pred_check_branch
        %146 = sbr.rel (%p144) target = $region24
      $region23: #{tpu_custom_call.1} parent=5 // pred_region
        // Predicated region
        $region25: #{tpu_custom_call.1} parent=23 // pred_check
          %p147 = pneg %p46
        $region26: #{tpu_custom_call.1} parent=23 // pred_check_branch
          %149 = sbr.rel (%p147) target = $region28
        $region27: #{tpu_custom_call.1} parent=23 // pred_region
          %p150 = scmp.lt.s32.totalorder %s19, 0
          %s151 = scalar_select %p150, %s19, 0
          %p152 = scmp.lt.s32.totalorder %s20, 2
          %s153 = scalar_select %p152, %s20, 2
          %s154 = smul.addr %s153, 2
          %s155 = smul.addr %s151, 6
          %s156 = sadd.s32 %s154, %s155
          %s157 = smul.addr %s156, 4
          %s158 = scalar_lea.vmem %s0, %s157
        $region28: #{tpu_custom_call.1} parent=23 // pred_fallthru
          _
      $region24: #{tpu_custom_call.1} parent=5 // pred_fallthru
        _
      %p159 = scmp.le.s32.totalorder 1, %s12
      %p160 = scmp.lt.s32.totalorder %s12, 4
      %p161 = pnand %p159, %p160
      %p162 = pneg %p161
      // Predicated region
      $region29: #{tpu_custom_call.1} parent=5 // pred_check
        _
      $region30: #{tpu_custom_call.1} parent=5 // pred_check_branch
        %164 = sbr.rel (%p161) target = $region32
      $region31: #{tpu_custom_call.1} parent=5 // pred_region
        %s165 = ssub.s32 %s12, 1
        %p166 = scmp.lt.s32.totalorder %s21, 0
        %s167 = scalar_select %p166, %s21, 0
        %p168 = scmp.lt.s32.totalorder %s22, 2
        %s169 = scalar_select %p168, %s22, 2
        %s170 = smul.addr %s169, 2
        %s171 = smul.addr %s167, 6
        %s172 = sadd.s32 %s170, %s171
        %s173 = smul.addr %s172, 4
        %s174 = scalar_lea.vmem %s0, %s173
        %p175 = pneg %p52
        %p176 = pneg %p49
        %p177 = pneg %p73
        %p178 = pneg %p70
        %p179 = pneg %p94
        %p180 = pneg %p91
        %p181 = pneg %p122
        %p182 = pneg %p119
        %s183 = sand.u32 %s109, 1
        %s184 = scalar_lea.sflag [#allocation3], %s183
        %s185 = sand.u32 %s109, 1
        %s186 = smul.addr %s185, 16
        %s187 = scalar_lea.vmem [#allocation2], %s186
        %p188 = scmp.lt.s32.totalorder %s21, 0
        %s189 = scalar_select %p188, %s21, 0
        %p190 = scmp.lt.s32.totalorder %s22, 2
        %s191 = scalar_select %p190, %s22, 2
        %s192 = smul.addr %s191, 2
        %s193 = smul.addr %s189, 6
        %s194 = sadd.s32 %s192, %s193
        %s195 = smul.addr %s194, 4
        %s196 = scalar_lea.vmem %s0, %s195
        %v198 = vld [vmem:[%s196] sm:$0xff]
        %v199 = vld [vmem:[%s1] sm:$0xf]
        %v200 = vld [vmem:[%s1 + $0x4] sm:$0xf]
        %s201 = scalar_lea.vmem %s1, 8
        %v202 = vld [vmem:[%s201] sm:$0xf]
        %v203 = vld [vmem:[%s201 + $0x4] sm:$0xf]
        %v206 = vunpack.c.l.b16 %v202
        %v207 = vunpack.c.l.b16 %v203
        %v208 = vpack.c.b16 %v207, %v206
        %v210 = vunpack.c.l.b16 %v198
        %v211 = vunpack.c.h.b16 %v198
        %v212 = vpack.c.b16 %v210, %v210
        %v213 = vpack.c.b16 %v211, %v211
        %214 = vrot.lane.b32.xlu0 %v212, 127
        %v215 = vpop.permute.xlu0 %214
        %216 = vrot.lane.b32.xlu0 %v213, 127
        %v217 = vpop.permute.xlu0 %216
        %vm218 = vcmask 1039360
        %v219 = vsel %vm218, %v215, %v217
        %vm220 = vcmask 64512
        %v222 = vsel %vm220, %v208, 0
        %vm224 = vcmask 1043456
        %v226 = vsel %vm224, %v219, 0
        %v229 = vsel %vm224, %v217, 0
        %231 = vmatpush.bf16.msra.mxu0 0
        %232 = vmatpush.bf16.msra.mxu0 0
        %233 = vmatpush.bf16.msra.mxu0 0
        %234 = vmatpush.bf16.msra.mxu0 0
        %235 = vmatpush.bf16.msra.mxu0 0
        %236 = vmatpush.bf16.msra.mxu0 0
        %237 = vmatpush.bf16.msra.mxu0 0
        %238 = vmatpush.bf16.msra.mxu0 %v226
        %239 = vmatmul.bf16.gmra.mxu0 %v222
        %v240 = vpop.f32.mrf.mxu0
        %v241 = vadd.f32 0.0, %v240
        %v242 = vpop.f32.mrf.mxu0
        %v243 = vadd.f32 0.0, %v242
        %244 = vdwg.mxu0
        %245 = vmatpush.bf16.msra.mxu0 0
        %246 = vmatpush.bf16.msra.mxu0 0
        %247 = vmatpush.bf16.msra.mxu0 0
        %248 = vmatpush.bf16.msra.mxu0 0
        %249 = vmatpush.bf16.msra.mxu0 0
        %250 = vmatpush.bf16.msra.mxu0 0
        %251 = vmatpush.bf16.msra.mxu0 0
        %252 = vmatpush.bf16.msra.mxu0 %v229
        %253 = vmatmul.bf16.gmra.mxu0 %v222
        %v254 = vpop.f32.mrf.mxu0
        %v255 = vadd.f32 0.0, %v254
        %v256 = vpop.f32.mrf.mxu0
        %v257 = vadd.f32 0.0, %v256
        %258 = vdwg.mxu0
        %v261 = vunpack.c.l.b16 %v199
        %v262 = vunpack.c.l.b16 %v200
        %v263 = vpack.c.b16 %v262, %v261
        %v265 = vsel %vm220, %v263, 0
        %v268 = vsel %vm224, %v212, 0
        %v271 = vsel %vm224, %v213, 0
        %273 = vmatpush.bf16.msra.mxu0 0
        %274 = vmatpush.bf16.msra.mxu0 0
        %275 = vmatpush.bf16.msra.mxu0 0
        %276 = vmatpush.bf16.msra.mxu0 0
        %277 = vmatpush.bf16.msra.mxu0 0
        %278 = vmatpush.bf16.msra.mxu0 0
        %279 = vmatpush.bf16.msra.mxu0 0
        %280 = vmatpush.bf16.msra.mxu0 %v268
        %281 = vmatmul.bf16.gmra.mxu0 %v265
        %v282 = vpop.f32.mrf.mxu0
        %v283 = vadd.f32 %v241, %v282
        %v284 = vpop.f32.mrf.mxu0
        %v285 = vadd.f32 %v243, %v284
        %286 = vdwg.mxu0
        %287 = vmatpush.bf16.msra.mxu0 0
        %288 = vmatpush.bf16.msra.mxu0 0
        %289 = vmatpush.bf16.msra.mxu0 0
        %290 = vmatpush.bf16.msra.mxu0 0
        %291 = vmatpush.bf16.msra.mxu0 0
        %292 = vmatpush.bf16.msra.mxu0 0
        %293 = vmatpush.bf16.msra.mxu0 0
        %294 = vmatpush.bf16.msra.mxu0 %v271
        %295 = vmatmul.bf16.gmra.mxu0 %v265
        %v296 = vpop.f32.mrf.mxu0
        %v297 = vadd.f32 %v255, %v296
        %v298 = vpop.f32.mrf.mxu0
        %v299 = vadd.f32 %v257, %v298
        %300 = vdwg.mxu0
        %s301 = scalar_lea.vmem %s1, 16
        %v302 = vld [vmem:[%s301] sm:$0xf]
        %v303 = vld [vmem:[%s301 + $0x4] sm:$0xf]
        %v306 = vunpack.c.l.b16 %v302
        %v307 = vunpack.c.l.b16 %v303
        %v308 = vpack.c.b16 %v307, %v306
        %309 = vrot.lane.b32.xlu0 %v212, 126
        %v310 = vpop.permute.xlu0 %309
        %311 = vrot.lane.b32.xlu0 %v213, 126
        %v312 = vpop.permute.xlu0 %311
        %vm313 = vcmask 1031168
        %v314 = vsel %vm313, %v310, %v312
        %v316 = vsel %vm220, %v308, 0
        %v319 = vsel %vm224, %v314, 0
        %v322 = vsel %vm224, %v312, 0
        %324 = vmatpush.bf16.msra.mxu0 0
        %325 = vmatpush.bf16.msra.mxu0 0
        %326 = vmatpush.bf16.msra.mxu0 0
        %327 = vmatpush.bf16.msra.mxu0 0
        %328 = vmatpush.bf16.msra.mxu0 0
        %329 = vmatpush.bf16.msra.mxu0 0
        %330 = vmatpush.bf16.msra.mxu0 0
        %331 = vmatpush.bf16.msra.mxu0 %v319
        %332 = vmatmul.bf16.gmra.mxu0 %v316
        %v333 = vpop.f32.mrf.mxu0
        %v334 = vadd.f32 0.0, %v333
        %v335 = vpop.f32.mrf.mxu0
        %v336 = vadd.f32 0.0, %v335
        %337 = vdwg.mxu0
        %338 = vmatpush.bf16.msra.mxu0 0
        %339 = vmatpush.bf16.msra.mxu0 0
        %340 = vmatpush.bf16.msra.mxu0 0
        %341 = vmatpush.bf16.msra.mxu0 0
        %342 = vmatpush.bf16.msra.mxu0 0
        %343 = vmatpush.bf16.msra.mxu0 0
        %344 = vmatpush.bf16.msra.mxu0 0
        %345 = vmatpush.bf16.msra.mxu0 %v322
        %346 = vmatmul.bf16.gmra.mxu0 %v316
        %v347 = vpop.f32.mrf.mxu0
        %v348 = vadd.f32 0.0, %v347
        %v349 = vpop.f32.mrf.mxu0
        %v350 = vadd.f32 0.0, %v349
        %351 = vdwg.mxu0
        %v352 = vadd.f32 %v283, %v334
        %v353 = vadd.f32 %v297, %v348
        %v354 = vadd.f32 %v285, %v336
        %v355 = vadd.f32 %v299, %v350
        %s356 = scalar_lea.vmem %s1, 24
        %v357 = vld [vmem:[%s356] sm:$0xf]
        %v358 = vld [vmem:[%s356 + $0x4] sm:$0xf]
        %v361 = vunpack.c.l.b16 %v357
        %v362 = vunpack.c.l.b16 %v358
        %v363 = vpack.c.b16 %v362, %v361
        %364 = vrot.lane.b32.xlu0 %v212, 106
        %v365 = vpop.permute.xlu0 %364
        %366 = vrot.lane.b32.xlu0 %v213, 106
        %v367 = vpop.permute.xlu0 %366
        %vm368 = vcmask 867328
        %v369 = vsel %vm368, %v365, %v367
        %v371 = vsel %vm220, %v363, 0
        %v374 = vsel %vm224, %v369, 0
        %v377 = vsel %vm224, %v367, 0
        %379 = vmatpush.bf16.msra.mxu0 0
        %380 = vmatpush.bf16.msra.mxu0 0
        %381 = vmatpush.bf16.msra.mxu0 0
        %382 = vmatpush.bf16.msra.mxu0 0
        %383 = vmatpush.bf16.msra.mxu0 0
        %384 = vmatpush.bf16.msra.mxu0 0
        %385 = vmatpush.bf16.msra.mxu0 0
        %386 = vmatpush.bf16.msra.mxu0 %v374
        %387 = vmatmul.bf16.gmra.mxu0 %v371
        %v388 = vpop.f32.mrf.mxu0
        %v389 = vadd.f32 0.0, %v388
        %v390 = vpop.f32.mrf.mxu0
        %v391 = vadd.f32 0.0, %v390
        %392 = vdwg.mxu0
        %393 = vmatpush.bf16.msra.mxu0 0
        %394 = vmatpush.bf16.msra.mxu0 0
        %395 = vmatpush.bf16.msra.mxu0 0
        %396 = vmatpush.bf16.msra.mxu0 0
        %397 = vmatpush.bf16.msra.mxu0 0
        %398 = vmatpush.bf16.msra.mxu0 0
        %399 = vmatpush.bf16.msra.mxu0 0
        %400 = vmatpush.bf16.msra.mxu0 %v377
        %401 = vmatmul.bf16.gmra.mxu0 %v371
        %v402 = vpop.f32.mrf.mxu0
        %v403 = vadd.f32 0.0, %v402
        %v404 = vpop.f32.mrf.mxu0
        %v405 = vadd.f32 0.0, %v404
        %406 = vdwg.mxu0
        %v407 = vadd.f32 %v352, %v389
        %v408 = vadd.f32 %v353, %v403
        %v409 = vadd.f32 %v354, %v391
        %v410 = vadd.f32 %v355, %v405
        %s411 = scalar_lea.vmem %s1, 32
        %v412 = vld [vmem:[%s411] sm:$0xf]
        %v413 = vld [vmem:[%s411 + $0x4] sm:$0xf]
        %v416 = vunpack.c.l.b16 %v412
        %v417 = vunpack.c.l.b16 %v413
        %v418 = vpack.c.b16 %v417, %v416
        %419 = vrot.lane.b32.xlu0 %v212, 105
        %v420 = vpop.permute.xlu0 %419
        %421 = vrot.lane.b32.xlu0 %v213, 105
        %v422 = vpop.permute.xlu0 %421
        %vm423 = vcmask 859136
        %v424 = vsel %vm423, %v420, %v422
        %v426 = vsel %vm220, %v418, 0
        %v429 = vsel %vm224, %v424, 0
        %v432 = vsel %vm224, %v422, 0
        %434 = vmatpush.bf16.msra.mxu0 0
        %435 = vmatpush.bf16.msra.mxu0 0
        %436 = vmatpush.bf16.msra.mxu0 0
        %437 = vmatpush.bf16.msra.mxu0 0
        %438 = vmatpush.bf16.msra.mxu0 0
        %439 = vmatpush.bf16.msra.mxu0 0
        %440 = vmatpush.bf16.msra.mxu0 0
        %441 = vmatpush.bf16.msra.mxu0 %v429
        %442 = vmatmul.bf16.gmra.mxu0 %v426
        %v443 = vpop.f32.mrf.mxu0
        %v444 = vadd.f32 0.0, %v443
        %v445 = vpop.f32.mrf.mxu0
        %v446 = vadd.f32 0.0, %v445
        %447 = vdwg.mxu0
        %448 = vmatpush.bf16.msra.mxu0 0
        %449 = vmatpush.bf16.msra.mxu0 0
        %450 = vmatpush.bf16.msra.mxu0 0
        %451 = vmatpush.bf16.msra.mxu0 0
        %452 = vmatpush.bf16.msra.mxu0 0
        %453 = vmatpush.bf16.msra.mxu0 0
        %454 = vmatpush.bf16.msra.mxu0 0
        %455 = vmatpush.bf16.msra.mxu0 %v432
        %456 = vmatmul.bf16.gmra.mxu0 %v426
        %v457 = vpop.f32.mrf.mxu0
        %v458 = vadd.f32 0.0, %v457
        %v459 = vpop.f32.mrf.mxu0
        %v460 = vadd.f32 0.0, %v459
        %461 = vdwg.mxu0
        %v462 = vadd.f32 %v407, %v444
        %v463 = vadd.f32 %v408, %v458
        %v464 = vadd.f32 %v409, %v446
        %v465 = vadd.f32 %v410, %v460
        %s466 = scalar_lea.vmem %s1, 40
        %v467 = vld [vmem:[%s466] sm:$0xf]
        %v468 = vld [vmem:[%s466 + $0x4] sm:$0xf]
        %v471 = vunpack.c.l.b16 %v467
        %v472 = vunpack.c.l.b16 %v468
        %v473 = vpack.c.b16 %v472, %v471
        %474 = vrot.lane.b32.xlu0 %v212, 104
        %v475 = vpop.permute.xlu0 %474
        %476 = vrot.lane.b32.xlu0 %v213, 104
        %v477 = vpop.permute.xlu0 %476
        %vm478 = vcmask 850944
        %v479 = vsel %vm478, %v475, %v477
        %v481 = vsel %vm220, %v473, 0
        %v484 = vsel %vm224, %v479, 0
        %v487 = vsel %vm224, %v477, 0
        %489 = vmatpush.bf16.msra.mxu0 0
        %490 = vmatpush.bf16.msra.mxu0 0
        %491 = vmatpush.bf16.msra.mxu0 0
        %492 = vmatpush.bf16.msra.mxu0 0
        %493 = vmatpush.bf16.msra.mxu0 0
        %494 = vmatpush.bf16.msra.mxu0 0
        %495 = vmatpush.bf16.msra.mxu0 0
        %496 = vmatpush.bf16.msra.mxu0 %v484
        %497 = vmatmul.bf16.gmra.mxu0 %v481
        %v498 = vpop.f32.mrf.mxu0
        %v499 = vadd.f32 0.0, %v498
        %v500 = vpop.f32.mrf.mxu0
        %v501 = vadd.f32 0.0, %v500
        %502 = vdwg.mxu0
        %503 = vmatpush.bf16.msra.mxu0 0
        %504 = vmatpush.bf16.msra.mxu0 0
        %505 = vmatpush.bf16.msra.mxu0 0
        %506 = vmatpush.bf16.msra.mxu0 0
        %507 = vmatpush.bf16.msra.mxu0 0
        %508 = vmatpush.bf16.msra.mxu0 0
        %509 = vmatpush.bf16.msra.mxu0 0
        %510 = vmatpush.bf16.msra.mxu0 %v487
        %511 = vmatmul.bf16.gmra.mxu0 %v481
        %v512 = vpop.f32.mrf.mxu0
        %v513 = vadd.f32 0.0, %v512
        %v514 = vpop.f32.mrf.mxu0
        %v515 = vadd.f32 0.0, %v514
        %516 = vdwg.mxu0
        %v517 = vadd.f32 %v462, %v499
        %v518 = vadd.f32 %v463, %v513
        %v519 = vadd.f32 %v464, %v501
        %v520 = vadd.f32 %v465, %v515
        %s521 = scalar_lea.vmem %s1, 48
        %v522 = vld [vmem:[%s521] sm:$0xf]
        %v523 = vld [vmem:[%s521 + $0x4] sm:$0xf]
        %v526 = vunpack.c.l.b16 %v522
        %v527 = vunpack.c.l.b16 %v523
        %v528 = vpack.c.b16 %v527, %v526
        %529 = vrot.lane.b32.xlu0 %v212, 84
        %v530 = vpop.permute.xlu0 %529
        %531 = vrot.lane.b32.xlu0 %v213, 84
        %v532 = vpop.permute.xlu0 %531
        %vm533 = vcmask 687104
        %v534 = vsel %vm533, %v530, %v532
        %v536 = vsel %vm220, %v528, 0
        %v539 = vsel %vm224, %v534, 0
        %v542 = vsel %vm224, %v532, 0
        %544 = vmatpush.bf16.msra.mxu0 0
        %545 = vmatpush.bf16.msra.mxu0 0
        %546 = vmatpush.bf16.msra.mxu0 0
        %547 = vmatpush.bf16.msra.mxu0 0
        %548 = vmatpush.bf16.msra.mxu0 0
        %549 = vmatpush.bf16.msra.mxu0 0
        %550 = vmatpush.bf16.msra.mxu0 0
        %551 = vmatpush.bf16.msra.mxu0 %v539
        %552 = vmatmul.bf16.gmra.mxu0 %v536
        %v553 = vpop.f32.mrf.mxu0
        %v554 = vadd.f32 0.0, %v553
        %v555 = vpop.f32.mrf.mxu0
        %v556 = vadd.f32 0.0, %v555
        %557 = vdwg.mxu0
        %558 = vmatpush.bf16.msra.mxu0 0
        %559 = vmatpush.bf16.msra.mxu0 0
        %560 = vmatpush.bf16.msra.mxu0 0
        %561 = vmatpush.bf16.msra.mxu0 0
        %562 = vmatpush.bf16.msra.mxu0 0
        %563 = vmatpush.bf16.msra.mxu0 0
        %564 = vmatpush.bf16.msra.mxu0 0
        %565 = vmatpush.bf16.msra.mxu0 %v542
        %566 = vmatmul.bf16.gmra.mxu0 %v536
        %v567 = vpop.f32.mrf.mxu0
        %v568 = vadd.f32 0.0, %v567
        %v569 = vpop.f32.mrf.mxu0
        %v570 = vadd.f32 0.0, %v569
        %571 = vdwg.mxu0
        %v572 = vadd.f32 %v517, %v554
        %v573 = vadd.f32 %v518, %v568
        %v574 = vadd.f32 %v519, %v556
        %v575 = vadd.f32 %v520, %v570
        %s576 = scalar_lea.vmem %s1, 56
        %v577 = vld [vmem:[%s576] sm:$0xf]
        %v578 = vld [vmem:[%s576 + $0x4] sm:$0xf]
        %v581 = vunpack.c.l.b16 %v577
        %v582 = vunpack.c.l.b16 %v578
        %v583 = vpack.c.b16 %v582, %v581
        %584 = vrot.lane.b32.xlu0 %v212, 83
        %v585 = vpop.permute.xlu0 %584
        %586 = vrot.lane.b32.xlu0 %v213, 83
        %v587 = vpop.permute.xlu0 %586
        %vm588 = vcmask 678912
        %v589 = vsel %vm588, %v585, %v587
        %v591 = vsel %vm220, %v583, 0
        %v594 = vsel %vm224, %v589, 0
        %v597 = vsel %vm224, %v587, 0
        %599 = vmatpush.bf16.msra.mxu0 0
        %600 = vmatpush.bf16.msra.mxu0 0
        %601 = vmatpush.bf16.msra.mxu0 0
        %602 = vmatpush.bf16.msra.mxu0 0
        %603 = vmatpush.bf16.msra.mxu0 0
        %604 = vmatpush.bf16.msra.mxu0 0
        %605 = vmatpush.bf16.msra.mxu0 0
        %606 = vmatpush.bf16.msra.mxu0 %v594
        %607 = vmatmul.bf16.gmra.mxu0 %v591
        %v608 = vpop.f32.mrf.mxu0
        %v609 = vadd.f32 0.0, %v608
        %v610 = vpop.f32.mrf.mxu0
        %v611 = vadd.f32 0.0, %v610
        %612 = vdwg.mxu0
        %613 = vmatpush.bf16.msra.mxu0 0
        %614 = vmatpush.bf16.msra.mxu0 0
        %615 = vmatpush.bf16.msra.mxu0 0
        %616 = vmatpush.bf16.msra.mxu0 0
        %617 = vmatpush.bf16.msra.mxu0 0
        %618 = vmatpush.bf16.msra.mxu0 0
        %619 = vmatpush.bf16.msra.mxu0 0
        %620 = vmatpush.bf16.msra.mxu0 %v597
        %621 = vmatmul.bf16.gmra.mxu0 %v591
        %v622 = vpop.f32.mrf.mxu0
        %v623 = vadd.f32 0.0, %v622
        %v624 = vpop.f32.mrf.mxu0
        %v625 = vadd.f32 0.0, %v624
        %626 = vdwg.mxu0
        %v627 = vadd.f32 %v572, %v609
        %v628 = vadd.f32 %v573, %v623
        %v629 = vadd.f32 %v574, %v611
        %v630 = vadd.f32 %v575, %v625
        %s631 = scalar_lea.vmem %s1, 64
        %v632 = vld [vmem:[%s631] sm:$0xf]
        %v633 = vld [vmem:[%s631 + $0x4] sm:$0xf]
        %v636 = vunpack.c.l.b16 %v632
        %v637 = vunpack.c.l.b16 %v633
        %v638 = vpack.c.b16 %v637, %v636
        %639 = vrot.lane.b32.xlu0 %v212, 82
        %v640 = vpop.permute.xlu0 %639
        %641 = vrot.lane.b32.xlu0 %v213, 82
        %v642 = vpop.permute.xlu0 %641
        %vm643 = vcmask 670720
        %v644 = vsel %vm643, %v640, %v642
        %v646 = vsel %vm220, %v638, 0
        %v649 = vsel %vm224, %v644, 0
        %v652 = vsel %vm224, %v642, 0
        %654 = vmatpush.bf16.msra.mxu0 0
        %655 = vmatpush.bf16.msra.mxu0 0
        %656 = vmatpush.bf16.msra.mxu0 0
        %657 = vmatpush.bf16.msra.mxu0 0
        %658 = vmatpush.bf16.msra.mxu0 0
        %659 = vmatpush.bf16.msra.mxu0 0
        %660 = vmatpush.bf16.msra.mxu0 0
        %661 = vmatpush.bf16.msra.mxu0 %v649
        %662 = vmatmul.bf16.gmra.mxu0 %v646
        %v663 = vpop.f32.mrf.mxu0
        %v664 = vadd.f32 0.0, %v663
        %v665 = vpop.f32.mrf.mxu0
        %v666 = vadd.f32 0.0, %v665
        %667 = vdwg.mxu0
        %668 = vmatpush.bf16.msra.mxu0 0
        %669 = vmatpush.bf16.msra.mxu0 0
        %670 = vmatpush.bf16.msra.mxu0 0
        %671 = vmatpush.bf16.msra.mxu0 0
        %672 = vmatpush.bf16.msra.mxu0 0
        %673 = vmatpush.bf16.msra.mxu0 0
        %674 = vmatpush.bf16.msra.mxu0 0
        %675 = vmatpush.bf16.msra.mxu0 %v652
        %676 = vmatmul.bf16.gmra.mxu0 %v646
        %v677 = vpop.f32.mrf.mxu0
        %v678 = vadd.f32 0.0, %v677
        %v679 = vpop.f32.mrf.mxu0
        %v680 = vadd.f32 0.0, %v679
        %681 = vdwg.mxu0
        %v682 = vadd.f32 %v627, %v664
        %v683 = vadd.f32 %v628, %v678
        %v684 = vadd.f32 %v629, %v666
        %v685 = vadd.f32 %v630, %v680
        %v686 = vld [vmem:[%s2] sm:$0xff]
        %v687 = vld [vmem:[%s2 + $0x8] sm:$0xff]
        %689 = vset.pattern.permute.xlu0 0
        %690 = vperm.xlu0 %689, %v686
        %v691 = vpop.permute.xlu0 %690
        %694 = vset.pattern.permute.xlu0 0
        %695 = vperm.xlu0 %694, %v687
        %v696 = vpop.permute.xlu0 %695
        %v698 = vadd.f32 %v682, %v691
        %v699 = vadd.f32 %v683, %v691
        %v700 = vadd.f32 %v684, %v696
        %v701 = vadd.f32 %v685, %v696
        %v702 = vpack.c.bf16 %v699, %v698
        %v703 = vpack.c.bf16 %v701, %v700
        %vm704 = vcmask 392196
        %vm705 = vmor %vm704, %vm224
        %706 = vst.msk [vmem:[%s187] sm:$0xff] %vm705, %v702
        %707 = vst.msk [vmem:[%s187 + $0x8] sm:$0xff] %vm705, %v703
        %s708 = sand.u32 %s109, 1
        %s709 = scalar_lea.sflag [#allocation3], %s708
        %s710 = sand.u32 %s109, 1
        %s711 = smul.addr %s710, 16
        %s712 = scalar_lea.vmem [#allocation2], %s711
        // Predicated region
        $region33: #{tpu_custom_call.1} parent=31 // pred_check
          %p713 = pneg %p119
        $region34: #{tpu_custom_call.1} parent=31 // pred_check_branch
          %715 = sbr.rel (%p713) target = $region36
        $region35: #{tpu_custom_call.1} parent=31 // pred_region
          %717 = vsyncadd %s709, 0
          %s718 = smul.addr %s22, 4
          %s719 = smul.addr %s21, 12
          %s720 = sadd.s32 %s718, %s719
          %s721 = smul.addr %s720, 4
          %s722 = scalar_lea.hbm %s3, %s721
          %s723 = sshll.u32 %s712, 4
          %s724 = int_to_ptr.vmem [resolvable:$true] %s723
          %s725 = sshll.u32 %s722, 4
          %s726 = int_to_ptr.hbm [resolvable:$true] %s725
          %731 = dma.vmem_to_hbm [thread:$0]  %s724, 256, %s726, %s709, 128, 128, 8
        $region36: #{tpu_custom_call.1} parent=31 // pred_fallthru
          _
      $region32: #{tpu_custom_call.1} parent=5 // pred_fallthru
        _
      %p732 = scmp.le.s32.totalorder 2, %s12
      // Predicated region
      $region37: #{tpu_custom_call.1} parent=5 // pred_check
        %p733 = pneg %p732
      $region38: #{tpu_custom_call.1} parent=5 // pred_check_branch
        %735 = sbr.rel (%p733) target = $region40
      $region39: #{tpu_custom_call.1} parent=5 // pred_region
        %s736 = ssub.s32 %s12, 2
        // Predicated region
        $region41: #{tpu_custom_call.1} parent=39 // pred_check
          %p737 = pneg %p125
        $region42: #{tpu_custom_call.1} parent=39 // pred_check_branch
          %739 = sbr.rel (%p737) target = $region44
        $region43: #{tpu_custom_call.1} parent=39 // pred_region
          %s740 = sand.u32 %s110, 1
          %s741 = scalar_lea.sflag [#allocation3], %s740
          %s742 = sand.u32 %s110, 1
          %s743 = smul.addr %s742, 16
          %s744 = scalar_lea.vmem [#allocation2], %s743
          %746 = dma.done %s741, 256
        $region44: #{tpu_custom_call.1} parent=39 // pred_fallthru
          _
      $region40: #{tpu_custom_call.1} parent=5 // pred_fallthru
        _
    $region6: #{tpu_custom_call.1} parent=1 // loop_footer
      %s16 = sadd.s32 1, %s12
    $region7: #{tpu_custom_call.1} parent=1 // loop_footer_branch
      %11 = sbr.rel target = $region3
    $region8: #{tpu_custom_call.1} parent=1 // loop_exit
      _
    %747 = vsyncpa [#allocation3], 1
    %s748 = scalar_lea.sflag [#allocation3], 1
    %749 = vsyncpa %s748, 1

</llo_original>
